<compile_context>
chip_gen: v7x
topology: tpu7x:2x2x1
jax: 0.10.0
libtpu: 0.0.40
codegen_flags: <defaults>
</compile_context>

<pallas_src>
import math

import jax
import jax.numpy as jnp
from jax import lax
from jax.experimental import pallas as pl
from jax.experimental.pallas import tpu as pltpu

# ------------------------- model configuration -------------------------------
B = 2                     # batch
C, H, W = 4, 16, 16       # cent_obs_shape (3D -> PlainCNN feature extractor)
K, STRIDE = 3, 1          # conv kernel / stride (module defaults)
HIDDEN = (32, 32)         # args['hidden_sizes']
ACT_DIM = 6               # action dimension
COUT = HIDDEN[0] // 4     # conv out channels = 8
OH, OW = H - K + STRIDE, W - K + STRIDE   # 14, 14
FLAT = COUT * OH * OW                     # 1568
COMBINED = HIDDEN[0] + ACT_DIM            # 38
HW = H * W                                # 256
H0 = HIDDEN[0]                            # 32
KKBC = K * K * B * C                      # 72

# The lane-shift conv lowering (and OH = H - K + STRIDE) assumes stride 1.
assert STRIDE == 1, "in-kernel lane-shift conv assumes stride 1"

# ----- packed-slab row offsets (all multiples of 16 -> bf16-pack aligned) -----
WS_R_WSEL = 0                      # conv weight, 16 rows
WS_R_WM1F = COUT * B               # 16, mlp1 (feature part), 32 rows
WS_R_WM2 = WS_R_WM1F + H0          # 48, mlp2, 32 rows
WS_R_WM1A = WS_R_WM2 + HIDDEN[1]   # 80, mlp1 (action part), ACT_DIM rows
WS_ROWS = WS_R_WM1A + 8            # 88
WS_LANES = 128

B_R_B1 = COUT * B                  # 16
B_R_BM1 = B_R_B1 + 1               # 17
B_R_BM2 = B_R_BM1 + 1              # 18
B_R_WM3 = B_R_BM2 + 1              # 19
B_R_BM3 = B_R_WM3 + 1              # 20
BIAS_ROWS = 24

VMEM_SPEC = pl.BlockSpec(memory_space=pltpu.MemorySpace.VMEM)


# ------------------------------ Pallas kernel ---------------------------------
def qnet_kernel(x_ref, act_ref, ws_ref, bias_ref, w1_hbm, o_ref, w1_vmem, w1_sem):
    """Fused forward: conv(/255 folded, bias, ReLU) -> flatten/fc1 -> ReLU -> MLP.

    x_ref   : [B*C, H*W]         raw pixels, spatial flattened along lanes (f32)
    act_ref : [B, ACT_DIM]       actions (f32)
    ws_ref  : [WS_ROWS, 128]     bf16 slab: block-diag conv weight (x 1/255),
                                 mlp1(feat).T, mlp2.T, mlp1(act).T
    bias_ref: [BIAS_ROWS, 32]    f32 slab: conv bias, fc1/mlp biases, mlp3 row
    w1_hbm  : [COUT*H0, H*W]     fc1 weight (ANY/HBM), per-channel transposed on
                                 the padded HxW grid (zero at oh>=OH or ow>=OW)
    o_ref   : [B, 1]
    w1_vmem : VMEM scratch for w1_hbm; w1_sem: DMA semaphore
    """
    # ---- start the big fc1-weight copy first; it overlaps with im2col + conv --
    w1_copy = pltpu.make_async_copy(w1_hbm, w1_vmem, w1_sem)
    w1_copy.start()

    # ---- static views into the packed slabs -----------------------------------
    wsel = ws_ref[WS_R_WSEL:WS_R_WSEL + COUT * B, 0:KKBC]          # [16, 72] bf16
    wm1f = ws_ref[WS_R_WM1F:WS_R_WM1F + H0, 0:H0]                  # [32, 32] bf16
    wm2 = ws_ref[WS_R_WM2:WS_R_WM2 + H0, 0:HIDDEN[1]]              # [32, 32] bf16
    wm1a = ws_ref[WS_R_WM1A:WS_R_WM1A + ACT_DIM, 0:H0]             # [ 6, 32] bf16
    bconv = bias_ref[0:COUT * B, 0:1]                              # [16, 1]
    b1 = bias_ref[B_R_B1:B_R_B1 + 1, :]                            # [1, 32]
    bm1 = bias_ref[B_R_BM1:B_R_BM1 + 1, :]
    bm2 = bias_ref[B_R_BM2:B_R_BM2 + 1, :]
    wm3r = bias_ref[B_R_WM3:B_R_WM3 + 1, :]                        # [1, 32] f32
    bm3 = bias_ref[B_R_BM3:B_R_BM3 + 1, 0:1]                       # [1, 1]

    # ---- in-kernel im2col: 9 taps = 8 XLU lane rotations of the flat image ----
    # (rolls kept in f32 so every [8,256] piece is vreg-tile aligned; one cast
    #  to bf16 after the sublane concat feeds the MXU.)
    x2 = x_ref[...]                                                # [B*C, HW] f32
    parts = [x2]
    for kh in range(K):
        for kw in range(K):
            offs = kh * W + kw
            if offs == 0:
                continue
            # result[:, j] = x2[:, (j + offs) % HW]  (wrap positions are killed
            # later by the zero columns of the padded fc1 weight)
            parts.append(pltpu.roll(x2, shift=HW - offs, axis=1))
    xall = jnp.concatenate(parts, axis=0).astype(jnp.bfloat16)     # [72, 256]

    # ---- conv = one lane-dense bf16 matmul; rows ordered (co, b) ---------------
    conv = jnp.dot(wsel, xall, preferred_element_type=jnp.float32)  # [16, 256]
    conv = jnp.maximum(conv + bconv, 0.0).astype(jnp.bfloat16)

    # ---- fc1: per-channel NT matmuls, tree-reduced over channels ---------------
    w1_copy.wait()
    partials = []
    for co in range(COUT):
        lhs = conv[co * B:(co + 1) * B, :]                         # [2, 256]
        rhs = w1_vmem[co * H0:(co + 1) * H0, :]                    # [32, 256] bf16
        partials.append(
            lax.dot_general(lhs, rhs, (((1,), (1,)), ((), ())),
                            preferred_element_type=jnp.float32))   # [2, 32]
    while len(partials) > 1:                                       # 3-level tree
        partials = [partials[i] + partials[i + 1]
                    for i in range(0, len(partials), 2)]
    feat = jnp.maximum(partials[0] + b1, 0.0)                      # [B, H0] f32

    # ---- MLP head; cat([feat, actions]) @ W^T expressed as split matmul --------
    featb = feat.astype(jnp.bfloat16)
    actb = act_ref[...].astype(jnp.bfloat16)
    h1 = jnp.maximum(
        jnp.dot(featb, wm1f, preferred_element_type=jnp.float32)
        + jnp.dot(actb, wm1a, preferred_element_type=jnp.float32)
        + bm1, 0.0)
    h2 = jnp.maximum(
        jnp.dot(h1.astype(jnp.bfloat16), wm2, preferred_element_type=jnp.float32)
        + bm2, 0.0)
    # final [2,32]x[32,1] as VPU multiply + lane reduce (avoids an N=1 MXU pass)
    o_ref[...] = jnp.sum(h2 * wm3r, axis=-1, keepdims=True) + bm3


# ----------------------- one-time parameter preparation -----------------------
def prepare_params(p):
    """Hoist all weight layout work out of the forward path (run once)."""
    inv = jnp.float32(1.0 / 255.0)

    # conv weight: fold /255, reorder to [s, c, co] with s = kh*K + kw, then build
    # a batch-block-diagonal matrix so conv is a single 2-D matmul against the
    # sublane-stacked rotated images:  rows (co, b), cols (s, b2, c).
    w_sc = (p["conv_w"] * inv).transpose(2, 3, 1, 0).reshape(K * K, C, COUT)
    wsel = jnp.einsum("sco,bd->obsdc", w_sc, jnp.eye(B, dtype=jnp.float32))
    wsel = wsel.reshape(COUT * B, KKBC)

    # fc1 weight: per conv channel, transposed ([H0, HW]) on the padded HxW grid
    # (zero at oh>=OH or ow>=OW) and stacked -> lane-dense [COUT*H0, HW] slab.
    w1r = p["fc1_w"].reshape(H0, COUT, OH, OW).transpose(1, 2, 3, 0)   # [co,oh,ow,h0]
    w1pad = jnp.zeros((COUT, H, W, H0), jnp.float32).at[:, :OH, :OW, :].set(w1r)
    w1T = w1pad.transpose(0, 3, 1, 2).reshape(COUT * H0, HW).astype(jnp.bfloat16)

    # small bf16 weight slab: conv weight + MLP matrices (one DMA).
    wm1 = p["mlp1_w"]                                                  # [H0, COMBINED]
    wslab = jnp.zeros((WS_ROWS, WS_LANES), jnp.float32)
    wslab = wslab.at[WS_R_WSEL:WS_R_WSEL + COUT * B, 0:KKBC].set(wsel)
    wslab = wslab.at[WS_R_WM1F:WS_R_WM1F + H0, 0:H0].set(wm1[:, :H0].T)
    wslab = wslab.at[WS_R_WM2:WS_R_WM2 + H0, 0:HIDDEN[1]].set(p["mlp2_w"].T)
    wslab = wslab.at[WS_R_WM1A:WS_R_WM1A + ACT_DIM, 0:H0].set(wm1[:, H0:].T)
    wslab = wslab.astype(jnp.bfloat16)

    # f32 bias / small-vector slab (one DMA).
    bias = jnp.zeros((BIAS_ROWS, 32), jnp.float32)
    bias = bias.at[0:COUT * B, 0].set(jnp.repeat(p["conv_b"], B))      # rows (co,b)
    bias = bias.at[B_R_B1, :].set(p["fc1_b"])
    bias = bias.at[B_R_BM1, :].set(p["mlp1_b"])
    bias = bias.at[B_R_BM2, :].set(p["mlp2_b"])
    bias = bias.at[B_R_WM3, :].set(p["mlp3_w"][0])                     # kept f32
    bias = bias.at[B_R_BM3, 0].set(p["mlp3_b"][0])

    return dict(wslab=wslab, bias=bias, w1T=w1T)


# --------------------------------- forward ------------------------------------
@jax.jit
def continuous_qnet_forward(prep, cent_obs, actions):
    # Row-major reshape is a free bitcast: only per-forward op outside the kernel.
    x2 = cent_obs.astype(jnp.float32).reshape(B * C, H * W)
    return pl.pallas_call(
        qnet_kernel,
        out_shape=jax.ShapeDtypeStruct((B, 1), jnp.float32),
        in_specs=[VMEM_SPEC, VMEM_SPEC, VMEM_SPEC, VMEM_SPEC,
                  pl.BlockSpec(memory_space=pl.ANY)],   # fc1 weight stays in HBM
        out_specs=VMEM_SPEC,
        scratch_shapes=[pltpu.VMEM((COUT * H0, HW), jnp.bfloat16),
                        pltpu.SemaphoreType.DMA],
    )(x2, actions.astype(jnp.float32),
      prep["wslab"], prep["bias"], prep["w1T"])


# --------------------------- deterministic params -----------------------------
def _uniform(key, shape, bound):
    return jax.random.uniform(key, shape, jnp.float32, -bound, bound)


def init_params(key):
    ks = jax.random.split(key, 10)
    p = {}
    b = 1.0 / math.sqrt(C * K * K)
    p["conv_w"] = _uniform(ks[0], (COUT, C, K, K), b)
    p["conv_b"] = _uniform(ks[1], (COUT,), b)
    b = 1.0 / math.sqrt(FLAT)
    p["fc1_w"] = _uniform(ks[2], (HIDDEN[0], FLAT), b)
    p["fc1_b"] = _uniform(ks[3], (HIDDEN[0],), b)
    b = 1.0 / math.sqrt(COMBINED)
    p["mlp1_w"] = _uniform(ks[4], (HIDDEN[0], COMBINED), b)
    p["mlp1_b"] = _uniform(ks[5], (HIDDEN[0],), b)
    b = 1.0 / math.sqrt(HIDDEN[0])
    p["mlp2_w"] = _uniform(ks[6], (HIDDEN[1], HIDDEN[0]), b)
    p["mlp2_b"] = _uniform(ks[7], (HIDDEN[1],), b)
    b = 1.0 / math.sqrt(HIDDEN[1])
    p["mlp3_w"] = _uniform(ks[8], (1, HIDDEN[1]), b)
    p["mlp3_b"] = _uniform(ks[9], (1,), b)
    return p


# ------------------------------ pure-JAX reference ----------------------------
def reference_forward(params, cent_obs, actions):
    x = cent_obs.astype(jnp.float32) / 255.0
    conv = lax.conv_general_dilated(
        x, params["conv_w"], (STRIDE, STRIDE), "VALID",
        dimension_numbers=("NCHW", "OIHW", "NCHW"))
    conv = jnp.maximum(conv + params["conv_b"][None, :, None, None], 0.0)
    flat = conv.reshape(B, -1)                                   # torch Flatten
    f = jnp.maximum(flat @ params["fc1_w"].T + params["fc1_b"], 0.0)
    h = jnp.concatenate([f, actions.astype(jnp.float32)], axis=-1)
    h = jnp.maximum(h @ params["mlp1_w"].T + params["mlp1_b"], 0.0)
    h = jnp.maximum(h @ params["mlp2_w"].T + params["mlp2_b"], 0.0)
    return h @ params["mlp3_w"].T + params["mlp3_b"]


# ----------------------------------- main --------------------------------------
if __name__ == "__main__":
    key = jax.random.PRNGKey(0)
    kp, ko, ka = jax.random.split(key, 3)

    params = init_params(kp)
    cent_obs = jax.random.uniform(ko, (B, C, H, W), jnp.float32, 0.0, 255.0)
    actions = jax.random.uniform(ka, (B, ACT_DIM), jnp.float32, -1.0, 1.0)

    prep = prepare_params(params)            # one-time weight preprocessing
    q = continuous_qnet_forward(prep, cent_obs, actions)
    q = jax.block_until_ready(q)

    q_ref = reference_forward(params, cent_obs, actions)
    assert q.shape == (B, 1)
    assert jnp.allclose(q, q_ref, atol=2e-2, rtol=2e-2), (q, q_ref)

    print("KERNEL_OK")
</pallas_src>

<mosaic_0001>
module attributes {stable_mosaic.version = 11 : i64} {
  func.func @qnet_kernel(%arg0: memref<8x256xf32, #tpu.memory_space<vmem>>, %arg1: memref<2x6xf32, #tpu.memory_space<vmem>>, %arg2: memref<88x128xbf16, #tpu.memory_space<vmem>>, %arg3: memref<24x32xf32, #tpu.memory_space<vmem>>, %arg4: memref<256x256xbf16, #tpu.memory_space<any>>, %arg5: memref<2x1xf32, #tpu.memory_space<vmem>>, %arg6: memref<256x256xbf16, #tpu.memory_space<vmem>>, %arg7: memref<!tpu.dma_semaphore, #tpu.memory_space<semaphore_mem>>) attributes {dimension_semantics = [], scalar_prefetch = 0 : i64, scratch_operands = 2 : i64, tpu.core_type = #tpu.core_type<tc>} {
    tpu.enqueue_dma source(%arg4 : memref<256x256xbf16, #tpu.memory_space<any>>) target(%arg6 : memref<256x256xbf16, #tpu.memory_space<vmem>>) target_semaphore(%arg7 : memref<!tpu.dma_semaphore, #tpu.memory_space<semaphore_mem>>)
    %c0 = arith.constant 0 : index
    %c0_0 = arith.constant 0 : index
    %0 = vector.load %arg2[%c0, %c0_0] : memref<88x128xbf16, #tpu.memory_space<vmem>>, vector<16x72xbf16>
    %c16 = arith.constant 16 : index
    %c0_1 = arith.constant 0 : index
    %1 = vector.load %arg2[%c16, %c0_1] : memref<88x128xbf16, #tpu.memory_space<vmem>>, vector<32x32xbf16>
    %c48 = arith.constant 48 : index
    %c0_2 = arith.constant 0 : index
    %2 = vector.load %arg2[%c48, %c0_2] : memref<88x128xbf16, #tpu.memory_space<vmem>>, vector<32x32xbf16>
    %c80 = arith.constant 80 : index
    %c0_3 = arith.constant 0 : index
    %3 = vector.load %arg2[%c80, %c0_3] : memref<88x128xbf16, #tpu.memory_space<vmem>>, vector<6x32xbf16>
    %c0_4 = arith.constant 0 : index
    %c0_5 = arith.constant 0 : index
    %4 = vector.load %arg3[%c0_4, %c0_5] : memref<24x32xf32, #tpu.memory_space<vmem>>, vector<16x1xf32>
    %c16_6 = arith.constant 16 : index
    %c0_7 = arith.constant 0 : index
    %5 = vector.load %arg3[%c16_6, %c0_7] : memref<24x32xf32, #tpu.memory_space<vmem>>, vector<1x32xf32>
    %c17 = arith.constant 17 : index
    %c0_8 = arith.constant 0 : index
    %6 = vector.load %arg3[%c17, %c0_8] : memref<24x32xf32, #tpu.memory_space<vmem>>, vector<1x32xf32>
    %c18 = arith.constant 18 : index
    %c0_9 = arith.constant 0 : index
    %7 = vector.load %arg3[%c18, %c0_9] : memref<24x32xf32, #tpu.memory_space<vmem>>, vector<1x32xf32>
    %c19 = arith.constant 19 : index
    %c0_10 = arith.constant 0 : index
    %8 = vector.load %arg3[%c19, %c0_10] : memref<24x32xf32, #tpu.memory_space<vmem>>, vector<1x32xf32>
    %c20 = arith.constant 20 : index
    %c0_11 = arith.constant 0 : index
    %9 = vector.load %arg3[%c20, %c0_11] : memref<24x32xf32, #tpu.memory_space<vmem>>, vector<1x1xf32>
    %c0_12 = arith.constant 0 : index
    %c0_13 = arith.constant 0 : index
    %10 = vector.load %arg0[%c0_12, %c0_13] : memref<8x256xf32, #tpu.memory_space<vmem>>, vector<8x256xf32>
    %c255_i32 = arith.constant 255 : i32
    %11 = tpu.dynamic_rotate %10 by %c255_i32 dim 1 : vector<8x256xf32>, i32 -> vector<8x256xf32>
    %c254_i32 = arith.constant 254 : i32
    %12 = tpu.dynamic_rotate %10 by %c254_i32 dim 1 : vector<8x256xf32>, i32 -> vector<8x256xf32>
    %c240_i32 = arith.constant 240 : i32
    %13 = tpu.dynamic_rotate %10 by %c240_i32 dim 1 : vector<8x256xf32>, i32 -> vector<8x256xf32>
    %c239_i32 = arith.constant 239 : i32
    %14 = tpu.dynamic_rotate %10 by %c239_i32 dim 1 : vector<8x256xf32>, i32 -> vector<8x256xf32>
    %c238_i32 = arith.constant 238 : i32
    %15 = tpu.dynamic_rotate %10 by %c238_i32 dim 1 : vector<8x256xf32>, i32 -> vector<8x256xf32>
    %c224_i32 = arith.constant 224 : i32
    %16 = tpu.dynamic_rotate %10 by %c224_i32 dim 1 : vector<8x256xf32>, i32 -> vector<8x256xf32>
    %c223_i32 = arith.constant 223 : i32
    %17 = tpu.dynamic_rotate %10 by %c223_i32 dim 1 : vector<8x256xf32>, i32 -> vector<8x256xf32>
    %c222_i32 = arith.constant 222 : i32
    %18 = tpu.dynamic_rotate %10 by %c222_i32 dim 1 : vector<8x256xf32>, i32 -> vector<8x256xf32>
    %19 = tpu.concatenate %10, %11, %12, %13, %14, %15, %16, %17, %18 in 0 : vector<8x256xf32>, vector<8x256xf32>, vector<8x256xf32>, vector<8x256xf32>, vector<8x256xf32>, vector<8x256xf32>, vector<8x256xf32>, vector<8x256xf32>, vector<8x256xf32> -> vector<72x256xf32>
    %20 = arith.truncf %19 : vector<72x256xf32> to vector<72x256xbf16>
    %cst = arith.constant dense<0.000000e+00> : vector<16x256xf32>
    %21 = tpu.matmul %0, %20, %cst {dimension_numbers = #tpu.dot_dimension_numbers<[1], [0], [0], [1], [0, 0, 1, 1], [], []>} : vector<16x72xbf16>, vector<72x256xbf16>, vector<16x256xf32> -> vector<16x256xf32>
    %22 = vector.broadcast %4 : vector<16x1xf32> to vector<16x256xf32>
    %23 = arith.addf %21, %22 : vector<16x256xf32>
    %cst_14 = arith.constant 0.000000e+00 : f32
    %24 = vector.broadcast %cst_14 : f32 to vector<16x256xf32>
    %25 = arith.maximumf %23, %24 : vector<16x256xf32>
    %26 = arith.truncf %25 : vector<16x256xf32> to vector<16x256xbf16>
    tpu.wait_dma2 semaphore(%arg7 : memref<!tpu.dma_semaphore, #tpu.memory_space<semaphore_mem>>) src(%arg4 : memref<256x256xbf16, #tpu.memory_space<any>>) dst(%arg6 : memref<256x256xbf16, #tpu.memory_space<vmem>>)
    %27 = vector.extract_strided_slice %26 {offsets = [0, 0], sizes = [2, 256], strides = [1, 1]} : vector<16x256xbf16> to vector<2x256xbf16>
    %c0_15 = arith.constant 0 : index
    %c0_16 = arith.constant 0 : index
    %28 = vector.load %arg6[%c0_15, %c0_16] : memref<256x256xbf16, #tpu.memory_space<vmem>>, vector<32x256xbf16>
    %cst_17 = arith.constant dense<0.000000e+00> : vector<2x32xf32>
    %29 = tpu.matmul %27, %28, %cst_17 {dimension_numbers = #tpu.dot_dimension_numbers<[1], [1], [0], [0], [0, 0, 1, 0], [], []>} : vector<2x256xbf16>, vector<32x256xbf16>, vector<2x32xf32> -> vector<2x32xf32>
    %30 = vector.extract_strided_slice %26 {offsets = [2, 0], sizes = [2, 256], strides = [1, 1]} : vector<16x256xbf16> to vector<2x256xbf16>
    %c32 = arith.constant 32 : index
    %c0_18 = arith.constant 0 : index
    %31 = vector.load %arg6[%c32, %c0_18] : memref<256x256xbf16, #tpu.memory_space<vmem>>, vector<32x256xbf16>
    %cst_19 = arith.constant dense<0.000000e+00> : vector<2x32xf32>
    %32 = tpu.matmul %30, %31, %cst_19 {dimension_numbers = #tpu.dot_dimension_numbers<[1], [1], [0], [0], [0, 0, 1, 0], [], []>} : vector<2x256xbf16>, vector<32x256xbf16>, vector<2x32xf32> -> vector<2x32xf32>
    %33 = vector.extract_strided_slice %26 {offsets = [4, 0], sizes = [2, 256], strides = [1, 1]} : vector<16x256xbf16> to vector<2x256xbf16>
    %c64 = arith.constant 64 : index
    %c0_20 = arith.constant 0 : index
    %34 = vector.load %arg6[%c64, %c0_20] : memref<256x256xbf16, #tpu.memory_space<vmem>>, vector<32x256xbf16>
    %cst_21 = arith.constant dense<0.000000e+00> : vector<2x32xf32>
    %35 = tpu.matmul %33, %34, %cst_21 {dimension_numbers = #tpu.dot_dimension_numbers<[1], [1], [0], [0], [0, 0, 1, 0], [], []>} : vector<2x256xbf16>, vector<32x256xbf16>, vector<2x32xf32> -> vector<2x32xf32>
    %36 = vector.extract_strided_slice %26 {offsets = [6, 0], sizes = [2, 256], strides = [1, 1]} : vector<16x256xbf16> to vector<2x256xbf16>
    %c96 = arith.constant 96 : index
    %c0_22 = arith.constant 0 : index
    %37 = vector.load %arg6[%c96, %c0_22] : memref<256x256xbf16, #tpu.memory_space<vmem>>, vector<32x256xbf16>
    %cst_23 = arith.constant dense<0.000000e+00> : vector<2x32xf32>
    %38 = tpu.matmul %36, %37, %cst_23 {dimension_numbers = #tpu.dot_dimension_numbers<[1], [1], [0], [0], [0, 0, 1, 0], [], []>} : vector<2x256xbf16>, vector<32x256xbf16>, vector<2x32xf32> -> vector<2x32xf32>
    %39 = vector.extract_strided_slice %26 {offsets = [8, 0], sizes = [2, 256], strides = [1, 1]} : vector<16x256xbf16> to vector<2x256xbf16>
    %c128 = arith.constant 128 : index
    %c0_24 = arith.constant 0 : index
    %40 = vector.load %arg6[%c128, %c0_24] : memref<256x256xbf16, #tpu.memory_space<vmem>>, vector<32x256xbf16>
    %cst_25 = arith.constant dense<0.000000e+00> : vector<2x32xf32>
    %41 = tpu.matmul %39, %40, %cst_25 {dimension_numbers = #tpu.dot_dimension_numbers<[1], [1], [0], [0], [0, 0, 1, 0], [], []>} : vector<2x256xbf16>, vector<32x256xbf16>, vector<2x32xf32> -> vector<2x32xf32>
    %42 = vector.extract_strided_slice %26 {offsets = [10, 0], sizes = [2, 256], strides = [1, 1]} : vector<16x256xbf16> to vector<2x256xbf16>
    %c160 = arith.constant 160 : index
    %c0_26 = arith.constant 0 : index
    %43 = vector.load %arg6[%c160, %c0_26] : memref<256x256xbf16, #tpu.memory_space<vmem>>, vector<32x256xbf16>
    %cst_27 = arith.constant dense<0.000000e+00> : vector<2x32xf32>
    %44 = tpu.matmul %42, %43, %cst_27 {dimension_numbers = #tpu.dot_dimension_numbers<[1], [1], [0], [0], [0, 0, 1, 0], [], []>} : vector<2x256xbf16>, vector<32x256xbf16>, vector<2x32xf32> -> vector<2x32xf32>
    %45 = vector.extract_strided_slice %26 {offsets = [12, 0], sizes = [2, 256], strides = [1, 1]} : vector<16x256xbf16> to vector<2x256xbf16>
    %c192 = arith.constant 192 : index
    %c0_28 = arith.constant 0 : index
    %46 = vector.load %arg6[%c192, %c0_28] : memref<256x256xbf16, #tpu.memory_space<vmem>>, vector<32x256xbf16>
    %cst_29 = arith.constant dense<0.000000e+00> : vector<2x32xf32>
    %47 = tpu.matmul %45, %46, %cst_29 {dimension_numbers = #tpu.dot_dimension_numbers<[1], [1], [0], [0], [0, 0, 1, 0], [], []>} : vector<2x256xbf16>, vector<32x256xbf16>, vector<2x32xf32> -> vector<2x32xf32>
    %48 = vector.extract_strided_slice %26 {offsets = [14, 0], sizes = [2, 256], strides = [1, 1]} : vector<16x256xbf16> to vector<2x256xbf16>
    %c224 = arith.constant 224 : index
    %c0_30 = arith.constant 0 : index
    %49 = vector.load %arg6[%c224, %c0_30] : memref<256x256xbf16, #tpu.memory_space<vmem>>, vector<32x256xbf16>
    %cst_31 = arith.constant dense<0.000000e+00> : vector<2x32xf32>
    %50 = tpu.matmul %48, %49, %cst_31 {dimension_numbers = #tpu.dot_dimension_numbers<[1], [1], [0], [0], [0, 0, 1, 0], [], []>} : vector<2x256xbf16>, vector<32x256xbf16>, vector<2x32xf32> -> vector<2x32xf32>
    %51 = arith.addf %29, %32 : vector<2x32xf32>
    %52 = arith.addf %35, %38 : vector<2x32xf32>
    %53 = arith.addf %41, %44 : vector<2x32xf32>
    %54 = arith.addf %47, %50 : vector<2x32xf32>
    %55 = arith.addf %51, %52 : vector<2x32xf32>
    %56 = arith.addf %53, %54 : vector<2x32xf32>
    %57 = arith.addf %55, %56 : vector<2x32xf32>
    %58 = vector.broadcast %5 : vector<1x32xf32> to vector<2x32xf32>
    %59 = arith.addf %57, %58 : vector<2x32xf32>
    %cst_32 = arith.constant 0.000000e+00 : f32
    %60 = vector.broadcast %cst_32 : f32 to vector<2x32xf32>
    %61 = arith.maximumf %59, %60 : vector<2x32xf32>
    %62 = arith.truncf %61 : vector<2x32xf32> to vector<2x32xbf16>
    %c0_33 = arith.constant 0 : index
    %c0_34 = arith.constant 0 : index
    %63 = vector.load %arg1[%c0_33, %c0_34] : memref<2x6xf32, #tpu.memory_space<vmem>>, vector<2x6xf32>
    %64 = arith.truncf %63 : vector<2x6xf32> to vector<2x6xbf16>
    %cst_35 = arith.constant dense<0.000000e+00> : vector<2x32xf32>
    %65 = tpu.matmul %62, %1, %cst_35 {dimension_numbers = #tpu.dot_dimension_numbers<[1], [0], [0], [1], [0, 0, 1, 1], [], []>} : vector<2x32xbf16>, vector<32x32xbf16>, vector<2x32xf32> -> vector<2x32xf32>
    %cst_36 = arith.constant dense<0.000000e+00> : vector<2x32xf32>
    %66 = tpu.matmul %64, %3, %cst_36 {dimension_numbers = #tpu.dot_dimension_numbers<[1], [0], [0], [1], [0, 0, 1, 1], [], []>} : vector<2x6xbf16>, vector<6x32xbf16>, vector<2x32xf32> -> vector<2x32xf32>
    %67 = arith.addf %65, %66 : vector<2x32xf32>
    %68 = vector.broadcast %6 : vector<1x32xf32> to vector<2x32xf32>
    %69 = arith.addf %67, %68 : vector<2x32xf32>
    %cst_37 = arith.constant 0.000000e+00 : f32
    %70 = vector.broadcast %cst_37 : f32 to vector<2x32xf32>
    %71 = arith.maximumf %69, %70 : vector<2x32xf32>
    %72 = arith.truncf %71 : vector<2x32xf32> to vector<2x32xbf16>
    %cst_38 = arith.constant dense<0.000000e+00> : vector<2x32xf32>
    %73 = tpu.matmul %72, %2, %cst_38 {dimension_numbers = #tpu.dot_dimension_numbers<[1], [0], [0], [1], [0, 0, 1, 1], [], []>} : vector<2x32xbf16>, vector<32x32xbf16>, vector<2x32xf32> -> vector<2x32xf32>
    %74 = vector.broadcast %7 : vector<1x32xf32> to vector<2x32xf32>
    %75 = arith.addf %73, %74 : vector<2x32xf32>
    %cst_39 = arith.constant 0.000000e+00 : f32
    %76 = vector.broadcast %cst_39 : f32 to vector<2x32xf32>
    %77 = arith.maximumf %75, %76 : vector<2x32xf32>
    %78 = vector.broadcast %8 : vector<1x32xf32> to vector<2x32xf32>
    %79 = arith.mulf %77, %78 : vector<2x32xf32>
    %cst_40 = arith.constant dense<0.000000e+00> : vector<2xf32>
    %80 = vector.multi_reduction <add>, %79, %cst_40 [1] : vector<2x32xf32> to vector<2xf32>
    %81 = vector.shape_cast %80 : vector<2xf32> to vector<2x1xf32>
    %82 = vector.broadcast %9 : vector<1x1xf32> to vector<2x1xf32>
    %83 = arith.addf %81, %82 : vector<2x1xf32>
    %c0_41 = arith.constant 0 : index
    %c0_42 = arith.constant 0 : index
    %84 = vector.load %arg5[%c0_41, %c0_42] : memref<2x1xf32, #tpu.memory_space<vmem>>, vector<2x1xf32>
    tpu.vector_store %arg5[%c0_41, %c0_42], %83 {strides = array<i32>} : memref<2x1xf32, #tpu.memory_space<vmem>>, vector<2x1xf32>,
    return
  }
}

</mosaic_0001>

<llo_original>
// kernel: continuous_qnet_forward.1
$region0: #{continuous_qnet_forward.1}
  #allocation0 [shape = 'u32[]', space=smem, size = 0x4, offset = 0x4, fixed_abs, tag = 'smem constant byte address 0x4 - core index']
  #allocation1 [shape = 'u32[144,128]{1,0:T(1,128)}', space=vmem, size = 0x12000, scoped, tag = 'internal scratch']
  #allocation2 [shape = 'bf16[256,256]{1,0:T(16,128)(2,1)}', space=vmem, size = 0x20000, scoped, tag = 'scratch operand']
  #allocation3 [shape = 's32[1]{0}', space=sflag, size = 0x4, scoped, tag = 'scratch operand']
  #allocation4 [shape = 's32[]', space=sflag, size = 0x4, offset = 0, fixed_abs, tag = 'sflag constant byte address 0x0 - dummy sync flag']
  %s0 = inlined_call_operand.vmem [shape: f32[8,256], index: 0, kind: input, shape index: {}]
  %s1 = inlined_call_operand.vmem [shape: f32[2,6], index: 1, kind: input, shape index: {}]
  %s2 = inlined_call_operand.vmem [shape: bf16[88,128], index: 2, kind: input, shape index: {}]
  %s3 = inlined_call_operand.vmem [shape: f32[24,32], index: 3, kind: input, shape index: {}]
  %s4 = inlined_call_operand.hbm [shape: bf16[256,256], index: 4, kind: input, shape index: {}]
  %s5 = inlined_call_operand.vmem [shape: f32[2,1], index: 5, kind: output, shape index: {}]
  %s6 = sld [smem:[#allocation0]]
  $region26: #{continuous_qnet_forward.1} parent=0
    _
  %s8 = ssub.s32 1, %s6
  %s9 = scalar_select 0, %s8, %s6
  $region1: #{continuous_qnet_forward.1} parent=0
    #allocation5 [shape = 'u32[9]{0}', space=smem, size = 0x24, scoped, tag = 'DMA stride descriptor']
    // Predicated region
    $region2: #{continuous_qnet_forward.1} parent=1 // pred_check
      _
    $region3: #{continuous_qnet_forward.1} parent=1 // pred_check_branch
      %11 = sbr.rel (0) target = $region5
    $region4: #{continuous_qnet_forward.1} parent=1 // pred_region
      _
    $region5: #{continuous_qnet_forward.1} parent=1 // pred_fallthru
      _
    // Predicated region
    $region6: #{continuous_qnet_forward.1} parent=1 // pred_check
      _
    $region7: #{continuous_qnet_forward.1} parent=1 // pred_check_branch
      %13 = sbr.rel (0) target = $region9
    $region8: #{continuous_qnet_forward.1} parent=1 // pred_region
      _
    $region9: #{continuous_qnet_forward.1} parent=1 // pred_fallthru
      _
    // Predicated region
    $region10: #{continuous_qnet_forward.1} parent=1 // pred_check
      _
    $region11: #{continuous_qnet_forward.1} parent=1 // pred_check_branch
      %15 = sbr.rel (0) target = $region13
    $region12: #{continuous_qnet_forward.1} parent=1 // pred_region
      _
    $region13: #{continuous_qnet_forward.1} parent=1 // pred_fallthru
      _
    // Predicated region
    $region14: #{continuous_qnet_forward.1} parent=1 // pred_check
      _
    $region15: #{continuous_qnet_forward.1} parent=1 // pred_check_branch
      %17 = sbr.rel (0) target = $region17
    $region16: #{continuous_qnet_forward.1} parent=1 // pred_region
      _
    $region17: #{continuous_qnet_forward.1} parent=1 // pred_fallthru
      _
    %s20 = sshll.u32 1, 14
    %s21 = sxor.u32 4294967295, %s20
    %s23 = sld [smem:[#allocation0]]
    %s24 = sadd.s32 2, %s23
    %s26 = sshll.u32 7, 26
    %s27 = sxor.u32 4294967295, %s26
    %s28 = sand.u32 0, %s27
    %s29 = sshll.u32 %s24, 26
    %s30 = sor.u32 %s28, %s29
    %s31 = sshll.u32 [#allocation2], 4
    %s32 = int_to_ptr.vmem [resolvable:$true] %s31
    %35 = sst [smem:[#allocation5]] 256
    %s36 = scalar_lea.smem [#allocation5], 1
    %37 = sst [smem:[%s36]] 256
    %s38 = scalar_lea.smem [#allocation5], 2
    %39 = sst [smem:[%s38]] 2
    %s40 = scalar_lea.smem [#allocation5], 3
    %41 = sst [smem:[%s40]] 64
    %s42 = scalar_lea.smem [#allocation5], 4
    %43 = sst [smem:[%s42]] 128
    %s44 = scalar_lea.smem [#allocation5], 5
    %45 = sst [smem:[%s44]] 2
    %s46 = scalar_lea.smem [#allocation5], 6
    %47 = sst [smem:[%s46]] 128
    %s48 = scalar_lea.smem [#allocation5], 7
    %49 = sst [smem:[%s48]] 64
    %s50 = scalar_lea.smem [#allocation5], 8
    %51 = sst [smem:[%s50]] 4
    %53 = dma.general %s4, 4096, %s32, [#allocation3], [#allocation4], [#allocation5], %s30, 0
    %v54 = vld [vmem:[%s2] sm:$0xf]
    %v55 = vld [vmem:[%s2 + $0x4] sm:$0xf]
    %v56 = vld [vmem:[%s2 + $0x8] sm:$0xf]
    %v57 = vld [vmem:[%s2 + $0xc] sm:$0xf]
    %v58 = vld [vmem:[%s2 + $0x10] sm:$0xf]
    %v59 = vld [vmem:[%s2 + $0x14] sm:$0xf]
    %v60 = vld [vmem:[%s2 + $0x18] sm:$0xf]
    %v61 = vld [vmem:[%s2 + $0x1c] sm:$0xf]
    %v62 = vld [vmem:[%s2 + $0x20] sm:$0xf]
    %v63 = vld [vmem:[%s2 + $0x24] sm:$0xf]
    %v64 = vld [vmem:[%s2 + $0x28] sm:$0x7]
    %v65 = vld [vmem:[%s3] sm:$0xff]
    %v66 = vld [vmem:[%s3 + $0x8] sm:$0xff]
    %v67 = vld [vmem:[%s3 + $0x10] sm:$0x1]
    %v68 = vld [vmem:[%s3 + $0x11] sm:$0x1]
    %v69 = vld [vmem:[%s3 + $0x12] sm:$0x1]
    %v70 = vld [vmem:[%s3 + $0x13] sm:$0x1]
    %v71 = vld [vmem:[%s3 + $0x14] sm:$0x1]
    %v72 = vld [vmem:[%s0] sm:$0xff]
    %v73 = vld [vmem:[%s0 + $0x8] sm:$0xff]
    %74 = vrot.lane.b32.xlu0 %v72, 127
    %v75 = vpop.permute.xlu0 %74
    %76 = vrot.lane.b32.xlu0 %v73, 127
    %v77 = vpop.permute.xlu0 %76
    %v78 = vlaneseq
    %v79 = vand.u32 %v78, 127
    %vm80 = vcmp.lt.s32.totalorder %v79, 127
    %v81 = vsel %vm80, %v75, %v77
    %v82 = vsel %vm80, %v77, %v75
    %83 = vrot.lane.b32.xlu0 %v72, 126
    %v84 = vpop.permute.xlu0 %83
    %85 = vrot.lane.b32.xlu0 %v73, 126
    %v86 = vpop.permute.xlu0 %85
    %vm87 = vcmp.lt.s32.totalorder %v79, 126
    %v88 = vsel %vm87, %v84, %v86
    %v89 = vsel %vm87, %v86, %v84
    %90 = vrot.lane.b32.xlu0 %v72, 112
    %v91 = vpop.permute.xlu0 %90
    %92 = vrot.lane.b32.xlu0 %v73, 112
    %v93 = vpop.permute.xlu0 %92
    %vm94 = vcmp.lt.s32.totalorder %v79, 112
    %v95 = vsel %vm94, %v91, %v93
    %v96 = vsel %vm94, %v93, %v91
    %97 = vrot.lane.b32.xlu0 %v72, 111
    %v98 = vpop.permute.xlu0 %97
    %99 = vrot.lane.b32.xlu0 %v73, 111
    %v100 = vpop.permute.xlu0 %99
    %vm101 = vcmp.lt.s32.totalorder %v79, 111
    %v102 = vsel %vm101, %v98, %v100
    %v103 = vsel %vm101, %v100, %v98
    %104 = vrot.lane.b32.xlu0 %v72, 110
    %v105 = vpop.permute.xlu0 %104
    %106 = vrot.lane.b32.xlu0 %v73, 110
    %v107 = vpop.permute.xlu0 %106
    %vm108 = vcmp.lt.s32.totalorder %v79, 110
    %v109 = vsel %vm108, %v105, %v107
    %v110 = vsel %vm108, %v107, %v105
    %111 = vrot.lane.b32.xlu0 %v72, 96
    %v112 = vpop.permute.xlu0 %111
    %113 = vrot.lane.b32.xlu0 %v73, 96
    %v114 = vpop.permute.xlu0 %113
    %vm115 = vcmp.lt.s32.totalorder %v79, 96
    %v116 = vsel %vm115, %v112, %v114
    %v117 = vsel %vm115, %v114, %v112
    %118 = vrot.lane.b32.xlu0 %v72, 95
    %v119 = vpop.permute.xlu0 %118
    %120 = vrot.lane.b32.xlu0 %v73, 95
    %v121 = vpop.permute.xlu0 %120
    %vm122 = vcmp.lt.s32.totalorder %v79, 95
    %v123 = vsel %vm122, %v119, %v121
    %v124 = vsel %vm122, %v121, %v119
    %125 = vrot.lane.b32.xlu0 %v72, 94
    %v126 = vpop.permute.xlu0 %125
    %127 = vrot.lane.b32.xlu0 %v73, 94
    %v128 = vpop.permute.xlu0 %127
    %vm129 = vcmp.lt.s32.totalorder %v79, 94
    %v130 = vsel %vm129, %v126, %v128
    %v131 = vsel %vm129, %v128, %v126
    %v132 = vpack.c.bf16 %v81, %v72
    %v133 = vpack.c.bf16 %v82, %v73
    %v134 = vpack.c.bf16 %v95, %v88
    %v135 = vpack.c.bf16 %v96, %v89
    %v136 = vpack.c.bf16 %v109, %v102
    %v137 = vpack.c.bf16 %v110, %v103
    %v138 = vpack.c.bf16 %v123, %v116
    %v139 = vpack.c.bf16 %v124, %v117
    %v140 = vpack.c.bf16 %v130, %v130
    %v141 = vpack.c.bf16 %v131, %v131
    %143 = vset.pattern.permute.xlu0 0
    %144 = vperm.xlu0 %143, %v65
    %v145 = vpop.permute.xlu0 %144
    %148 = vset.pattern.permute.xlu0 0
    %149 = vperm.xlu0 %148, %v66
    %v150 = vpop.permute.xlu0 %149
    %v154 = vunpack.c.l.b16 %v54
    %v155 = vunpack.c.l.b16 %v55
    %v156 = vpack.c.b16 %v155, %v154
    %vm157 = vcmask 588800
    %v159 = vsel %vm157, %v156, 0
    %vm161 = vcmask 1043456
    %v163 = vsel %vm161, %v140, 0
    %v166 = vsel %vm161, %v141, 0
    %168 = vmatprep.subr.bf16.mxu0 %v133
    %169 = vmatpush1.bf16.msra.mxu0 %v132
    %170 = vmatprep.subr.bf16.mxu0 %v135
    %171 = vmatpush1.bf16.msra.mxu0 %v134
    %172 = vmatprep.subr.bf16.mxu0 %v137
    %173 = vmatpush1.bf16.msra.mxu0 %v136
    %174 = vmatprep.subr.bf16.mxu0 %v139
    %175 = vmatpush1.bf16.msra.mxu0 %v138
    %176 = vmatprep.subr.bf16.mxu0 %v166
    %177 = vmatpush1.bf16.msra.mxu0 %v163
    %178 = vmatprep.subr.bf16.mxu0 0
    %179 = vmatpush1.bf16.msra.mxu0 0
    %180 = vmatprep.subr.bf16.mxu0 0
    %181 = vmatpush1.bf16.msra.mxu0 0
    %182 = vmatprep.subr.bf16.mxu0 0
    %183 = vmatpush1.bf16.msra.mxu0 0
    %184 = vmatprep.subr.bf16.mxu0 0
    %185 = vmatpush1.bf16.msra.mxu0 0
    %186 = vmatprep.subr.bf16.mxu0 0
    %187 = vmatpush1.bf16.msra.mxu0 0
    %188 = vmatprep.subr.bf16.mxu0 0
    %189 = vmatpush1.bf16.msra.mxu0 0
    %190 = vmatprep.subr.bf16.mxu0 0
    %191 = vmatpush1.bf16.msra.mxu0 0
    %192 = vmatprep.subr.bf16.mxu0 0
    %193 = vmatpush1.bf16.msra.mxu0 0
    %194 = vmatprep.subr.bf16.mxu0 0
    %195 = vmatpush1.bf16.msra.mxu0 0
    %196 = vmatprep.subr.bf16.mxu0 0
    %197 = vmatpush1.bf16.msra.mxu0 0
    %198 = vmatprep.subr.bf16.mxu0 0
    %199 = vmatpush1.bf16.msra.mxu0 0
    %200 = vmatprep.mubr.bf16.mxu0 0
    %201 = vmatmul.mubr.bf16.gmra.mrb[0].mxu0 %v159
    %v202 = vpop.f32.mrb[0].mxu0
    %v203 = vadd.f32 %v145, %v202
    %v204 = vpop.f32.mrb[0].mxu0
    %v205 = vadd.f32 %v145, %v204
    %v206 = vpop.f32.mrb[0].mxu0
    %v207 = vadd.f32 %v150, %v206
    %v208 = vpop.f32.mrb[0].mxu0
    %v209 = vadd.f32 %v150, %v208
    %210 = vdwg.mxu0
    %v211 = vmax.f32 %v203, 0.0
    %v212 = vmax.f32 %v205, 0.0
    %v213 = vmax.f32 %v207, 0.0
    %v214 = vmax.f32 %v209, 0.0
    %v215 = vpack.c.bf16 %v213, %v211
    %v216 = vpack.c.bf16 %v214, %v212
    %s217 = smul.u32 4, 32
    %s218 = smul.u32 %s217, 2
    %s219 = sshll.u32 %s218, 4
    %220 = dma.done [#allocation3], %s219
    %v221 = vld [vmem:[#allocation2] sm:$0xff]
    %v222 = vld [vmem:[#allocation2 + $0x8] sm:$0xff]
    %v223 = vld [vmem:[#allocation2 + $0x10] sm:$0xff]
    %v224 = vld [vmem:[#allocation2 + $0x18] sm:$0xff]
    %v225 = vld [vmem:[#allocation2 + $0x20] sm:$0xff]
    %v226 = vld [vmem:[#allocation2 + $0x28] sm:$0xff]
    %v227 = vld [vmem:[#allocation2 + $0x30] sm:$0xff]
    %v228 = vld [vmem:[#allocation2 + $0x38] sm:$0xff]
    %v231 = vrot.slane %v215, 1
    %v232 = vrot.slane %v216, 1
    %235 = vmatprep.subr.bf16.mxu0 %v226
    %236 = vmatpush1.bf16.xpose.msra.mxu0 %v225
    %237 = vmatprep.subr.bf16.mxu0 %v228
    %238 = vmatpush1.bf16.xpose.msra.mxu0 %v227
    %239 = vmatprep.subr.bf16.mxu0 0
    %240 = vmatpush1.bf16.xpose.msra.mxu0 0
    %241 = vmatprep.subr.bf16.mxu0 0
    %242 = vmatpush1.bf16.xpose.msra.mxu0 0
    %243 = vmatprep.subr.bf16.mxu0 0
    %244 = vmatpush1.bf16.xpose.msra.mxu0 0
    %245 = vmatprep.subr.bf16.mxu0 0
    %246 = vmatpush1.bf16.xpose.msra.mxu0 0
    %247 = vmatprep.subr.bf16.mxu0 0
    %248 = vmatpush1.bf16.xpose.msra.mxu0 0
    %249 = vmatprep.subr.bf16.mxu0 0
    %250 = vmatpush1.bf16.xpose.msra.mxu0 0
    %251 = vmatprep.subr.bf16.mxu0 0
    %252 = vmatpush1.bf16.xpose.msra.mxu0 0
    %253 = vmatprep.subr.bf16.mxu0 0
    %254 = vmatpush1.bf16.xpose.msra.mxu0 0
    %255 = vmatprep.subr.bf16.mxu0 0
    %256 = vmatpush1.bf16.xpose.msra.mxu0 0
    %257 = vmatprep.subr.bf16.mxu0 0
    %258 = vmatpush1.bf16.xpose.msra.mxu0 0
    %259 = vmatprep.subr.bf16.mxu0 0
    %260 = vmatpush1.bf16.xpose.msra.mxu0 0
    %261 = vmatprep.subr.bf16.mxu0 0
    %262 = vmatpush1.bf16.xpose.msra.mxu0 0
    %263 = vmatprep.subr.bf16.mxu0 0
    %264 = vmatpush1.bf16.xpose.msra.mxu0 0
    %265 = vmatprep.subr.bf16.mxu0 0
    %266 = vmatpush1.bf16.xpose.msra.mxu0 0
    %267 = vmatprep.mubr.bf16.mxu0 %v232
    %268 = vmatmul.mubr.bf16.gmra.mrb[0].mxu0 %v231
    %v269 = vpop.f32.mrb[0].mxu0
    %v270 = vadd.f32 0.0, %v269
    %v271 = vpop.f32.mrb[0].mxu0
    %v272 = vpop.f32.mrb[0].mxu0
    %v273 = vpop.f32.mrb[0].mxu0
    %274 = vdwg.mxu0
    %v275 = vld [vmem:[#allocation2 + $0x40] sm:$0xff]
    %v276 = vld [vmem:[#allocation2 + $0x48] sm:$0xff]
    %v277 = vld [vmem:[#allocation2 + $0x50] sm:$0xff]
    %v278 = vld [vmem:[#allocation2 + $0x58] sm:$0xff]
    %v279 = vld [vmem:[#allocation2 + $0x60] sm:$0xff]
    %v280 = vld [vmem:[#allocation2 + $0x68] sm:$0xff]
    %v281 = vld [vmem:[#allocation2 + $0x70] sm:$0xff]
    %v282 = vld [vmem:[#allocation2 + $0x78] sm:$0xff]
    %v283 = vrot.slane %v215, 3
    %v284 = vrot.slane %v216, 3
    %287 = vmatprep.subr.bf16.mxu0 %v280
    %288 = vmatpush1.bf16.xpose.msra.mxu0 %v279
    %289 = vmatprep.subr.bf16.mxu0 %v282
    %290 = vmatpush1.bf16.xpose.msra.mxu0 %v281
    %291 = vmatprep.subr.bf16.mxu0 0
    %292 = vmatpush1.bf16.xpose.msra.mxu0 0
    %293 = vmatprep.subr.bf16.mxu0 0
    %294 = vmatpush1.bf16.xpose.msra.mxu0 0
    %295 = vmatprep.subr.bf16.mxu0 0
    %296 = vmatpush1.bf16.xpose.msra.mxu0 0
    %297 = vmatprep.subr.bf16.mxu0 0
    %298 = vmatpush1.bf16.xpose.msra.mxu0 0
    %299 = vmatprep.subr.bf16.mxu0 0
    %300 = vmatpush1.bf16.xpose.msra.mxu0 0
    %301 = vmatprep.subr.bf16.mxu0 0
    %302 = vmatpush1.bf16.xpose.msra.mxu0 0
    %303 = vmatprep.subr.bf16.mxu0 0
    %304 = vmatpush1.bf16.xpose.msra.mxu0 0
    %305 = vmatprep.subr.bf16.mxu0 0
    %306 = vmatpush1.bf16.xpose.msra.mxu0 0
    %307 = vmatprep.subr.bf16.mxu0 0
    %308 = vmatpush1.bf16.xpose.msra.mxu0 0
    %309 = vmatprep.subr.bf16.mxu0 0
    %310 = vmatpush1.bf16.xpose.msra.mxu0 0
    %311 = vmatprep.subr.bf16.mxu0 0
    %312 = vmatpush1.bf16.xpose.msra.mxu0 0
    %313 = vmatprep.subr.bf16.mxu0 0
    %314 = vmatpush1.bf16.xpose.msra.mxu0 0
    %315 = vmatprep.subr.bf16.mxu0 0
    %316 = vmatpush1.bf16.xpose.msra.mxu0 0
    %317 = vmatprep.subr.bf16.mxu0 0
    %318 = vmatpush1.bf16.xpose.msra.mxu0 0
    %319 = vmatprep.mubr.bf16.mxu0 %v284
    %320 = vmatmul.mubr.bf16.gmra.mrb[0].mxu0 %v283
    %v321 = vpop.f32.mrb[0].mxu0
    %v322 = vadd.f32 0.0, %v321
    %v323 = vpop.f32.mrb[0].mxu0
    %v324 = vpop.f32.mrb[0].mxu0
    %v325 = vpop.f32.mrb[0].mxu0
    %326 = vdwg.mxu0
    %v327 = vld [vmem:[#allocation2 + $0x80] sm:$0xff]
    %v328 = vld [vmem:[#allocation2 + $0x88] sm:$0xff]
    %v329 = vld [vmem:[#allocation2 + $0x90] sm:$0xff]
    %v330 = vld [vmem:[#allocation2 + $0x98] sm:$0xff]
    %v331 = vld [vmem:[#allocation2 + $0xa0] sm:$0xff]
    %v332 = vld [vmem:[#allocation2 + $0xa8] sm:$0xff]
    %v333 = vld [vmem:[#allocation2 + $0xb0] sm:$0xff]
    %v334 = vld [vmem:[#allocation2 + $0xb8] sm:$0xff]
    %v335 = vrot.slane %v215, 5
    %v336 = vrot.slane %v216, 5
    %339 = vmatprep.subr.bf16.mxu0 %v332
    %340 = vmatpush1.bf16.xpose.msra.mxu0 %v331
    %341 = vmatprep.subr.bf16.mxu0 %v334
    %342 = vmatpush1.bf16.xpose.msra.mxu0 %v333
    %343 = vmatprep.subr.bf16.mxu0 0
    %344 = vmatpush1.bf16.xpose.msra.mxu0 0
    %345 = vmatprep.subr.bf16.mxu0 0
    %346 = vmatpush1.bf16.xpose.msra.mxu0 0
    %347 = vmatprep.subr.bf16.mxu0 0
    %348 = vmatpush1.bf16.xpose.msra.mxu0 0
    %349 = vmatprep.subr.bf16.mxu0 0
    %350 = vmatpush1.bf16.xpose.msra.mxu0 0
    %351 = vmatprep.subr.bf16.mxu0 0
    %352 = vmatpush1.bf16.xpose.msra.mxu0 0
    %353 = vmatprep.subr.bf16.mxu0 0
    %354 = vmatpush1.bf16.xpose.msra.mxu0 0
    %355 = vmatprep.subr.bf16.mxu0 0
    %356 = vmatpush1.bf16.xpose.msra.mxu0 0
    %357 = vmatprep.subr.bf16.mxu0 0
    %358 = vmatpush1.bf16.xpose.msra.mxu0 0
    %359 = vmatprep.subr.bf16.mxu0 0
    %360 = vmatpush1.bf16.xpose.msra.mxu0 0
    %361 = vmatprep.subr.bf16.mxu0 0
    %362 = vmatpush1.bf16.xpose.msra.mxu0 0
    %363 = vmatprep.subr.bf16.mxu0 0
    %364 = vmatpush1.bf16.xpose.msra.mxu0 0
    %365 = vmatprep.subr.bf16.mxu0 0
    %366 = vmatpush1.bf16.xpose.msra.mxu0 0
    %367 = vmatprep.subr.bf16.mxu0 0
    %368 = vmatpush1.bf16.xpose.msra.mxu0 0
    %369 = vmatprep.subr.bf16.mxu0 0
    %370 = vmatpush1.bf16.xpose.msra.mxu0 0
    %371 = vmatprep.mubr.bf16.mxu0 %v336
    %372 = vmatmul.mubr.bf16.gmra.mrb[0].mxu0 %v335
    %v373 = vpop.f32.mrb[0].mxu0
    %v374 = vadd.f32 0.0, %v373
    %v375 = vpop.f32.mrb[0].mxu0
    %v376 = vpop.f32.mrb[0].mxu0
    %v377 = vpop.f32.mrb[0].mxu0
    %378 = vdwg.mxu0
    %v379 = vld [vmem:[#allocation2 + $0xc0] sm:$0xff]
    %v380 = vld [vmem:[#allocation2 + $0xc8] sm:$0xff]
    %v381 = vld [vmem:[#allocation2 + $0xd0] sm:$0xff]
    %v382 = vld [vmem:[#allocation2 + $0xd8] sm:$0xff]
    %v383 = vld [vmem:[#allocation2 + $0xe0] sm:$0xff]
    %v384 = vld [vmem:[#allocation2 + $0xe8] sm:$0xff]
    %v385 = vld [vmem:[#allocation2 + $0xf0] sm:$0xff]
    %v386 = vld [vmem:[#allocation2 + $0xf8] sm:$0xff]
    %v387 = vrot.slane %v215, 7
    %v388 = vrot.slane %v216, 7
    %391 = vmatprep.subr.bf16.mxu0 %v384
    %392 = vmatpush1.bf16.xpose.msra.mxu0 %v383
    %393 = vmatprep.subr.bf16.mxu0 %v386
    %394 = vmatpush1.bf16.xpose.msra.mxu0 %v385
    %395 = vmatprep.subr.bf16.mxu0 0
    %396 = vmatpush1.bf16.xpose.msra.mxu0 0
    %397 = vmatprep.subr.bf16.mxu0 0
    %398 = vmatpush1.bf16.xpose.msra.mxu0 0
    %399 = vmatprep.subr.bf16.mxu0 0
    %400 = vmatpush1.bf16.xpose.msra.mxu0 0
    %401 = vmatprep.subr.bf16.mxu0 0
    %402 = vmatpush1.bf16.xpose.msra.mxu0 0
    %403 = vmatprep.subr.bf16.mxu0 0
    %404 = vmatpush1.bf16.xpose.msra.mxu0 0
    %405 = vmatprep.subr.bf16.mxu0 0
    %406 = vmatpush1.bf16.xpose.msra.mxu0 0
    %407 = vmatprep.subr.bf16.mxu0 0
    %408 = vmatpush1.bf16.xpose.msra.mxu0 0
    %409 = vmatprep.subr.bf16.mxu0 0
    %410 = vmatpush1.bf16.xpose.msra.mxu0 0
    %411 = vmatprep.subr.bf16.mxu0 0
    %412 = vmatpush1.bf16.xpose.msra.mxu0 0
    %413 = vmatprep.subr.bf16.mxu0 0
    %414 = vmatpush1.bf16.xpose.msra.mxu0 0
    %415 = vmatprep.subr.bf16.mxu0 0
    %416 = vmatpush1.bf16.xpose.msra.mxu0 0
    %417 = vmatprep.subr.bf16.mxu0 0
    %418 = vmatpush1.bf16.xpose.msra.mxu0 0
    %419 = vmatprep.subr.bf16.mxu0 0
    %420 = vmatpush1.bf16.xpose.msra.mxu0 0
    %421 = vmatprep.subr.bf16.mxu0 0
    %422 = vmatpush1.bf16.xpose.msra.mxu0 0
    %423 = vmatprep.mubr.bf16.mxu0 %v388
    %424 = vmatmul.mubr.bf16.gmra.mrb[0].mxu0 %v387
    %v425 = vpop.f32.mrb[0].mxu0
    %v426 = vadd.f32 0.0, %v425
    %v427 = vpop.f32.mrb[0].mxu0
    %v428 = vpop.f32.mrb[0].mxu0
    %v429 = vpop.f32.mrb[0].mxu0
    %430 = vdwg.mxu0
    %431 = vmatprep.subr.bf16.mxu0 %v222
    %432 = vmatpush1.bf16.xpose.msra.mxu0 %v221
    %433 = vmatprep.subr.bf16.mxu0 %v224
    %434 = vmatpush1.bf16.xpose.msra.mxu0 %v223
    %435 = vmatprep.subr.bf16.mxu0 0
    %436 = vmatpush1.bf16.xpose.msra.mxu0 0
    %437 = vmatprep.subr.bf16.mxu0 0
    %438 = vmatpush1.bf16.xpose.msra.mxu0 0
    %439 = vmatprep.subr.bf16.mxu0 0
    %440 = vmatpush1.bf16.xpose.msra.mxu0 0
    %441 = vmatprep.subr.bf16.mxu0 0
    %442 = vmatpush1.bf16.xpose.msra.mxu0 0
    %443 = vmatprep.subr.bf16.mxu0 0
    %444 = vmatpush1.bf16.xpose.msra.mxu0 0
    %445 = vmatprep.subr.bf16.mxu0 0
    %446 = vmatpush1.bf16.xpose.msra.mxu0 0
    %447 = vmatprep.subr.bf16.mxu0 0
    %448 = vmatpush1.bf16.xpose.msra.mxu0 0
    %449 = vmatprep.subr.bf16.mxu0 0
    %450 = vmatpush1.bf16.xpose.msra.mxu0 0
    %451 = vmatprep.subr.bf16.mxu0 0
    %452 = vmatpush1.bf16.xpose.msra.mxu0 0
    %453 = vmatprep.subr.bf16.mxu0 0
    %454 = vmatpush1.bf16.xpose.msra.mxu0 0
    %455 = vmatprep.subr.bf16.mxu0 0
    %456 = vmatpush1.bf16.xpose.msra.mxu0 0
    %457 = vmatprep.subr.bf16.mxu0 0
    %458 = vmatpush1.bf16.xpose.msra.mxu0 0
    %459 = vmatprep.subr.bf16.mxu0 0
    %460 = vmatpush1.bf16.xpose.msra.mxu0 0
    %461 = vmatprep.subr.bf16.mxu0 0
    %462 = vmatpush1.bf16.xpose.msra.mxu0 0
    %463 = vmatprep.mubr.bf16.mxu0 %v216
    %464 = vmatmul.mubr.bf16.gmra.mrb[0].mxu0 %v215
    %v465 = vpop.f32.mrb[0].mxu0
    %v466 = vadd.f32 %v270, %v465
    %v467 = vpop.f32.mrb[0].mxu0
    %v468 = vpop.f32.mrb[0].mxu0
    %v469 = vpop.f32.mrb[0].mxu0
    %470 = vdwg.mxu0
    %v471 = vrot.slane %v215, 2
    %v472 = vrot.slane %v216, 2
    %475 = vmatprep.subr.bf16.mxu0 %v276
    %476 = vmatpush1.bf16.xpose.msra.mxu0 %v275
    %477 = vmatprep.subr.bf16.mxu0 %v278
    %478 = vmatpush1.bf16.xpose.msra.mxu0 %v277
    %479 = vmatprep.subr.bf16.mxu0 0
    %480 = vmatpush1.bf16.xpose.msra.mxu0 0
    %481 = vmatprep.subr.bf16.mxu0 0
    %482 = vmatpush1.bf16.xpose.msra.mxu0 0
    %483 = vmatprep.subr.bf16.mxu0 0
    %484 = vmatpush1.bf16.xpose.msra.mxu0 0
    %485 = vmatprep.subr.bf16.mxu0 0
    %486 = vmatpush1.bf16.xpose.msra.mxu0 0
    %487 = vmatprep.subr.bf16.mxu0 0
    %488 = vmatpush1.bf16.xpose.msra.mxu0 0
    %489 = vmatprep.subr.bf16.mxu0 0
    %490 = vmatpush1.bf16.xpose.msra.mxu0 0
    %491 = vmatprep.subr.bf16.mxu0 0
    %492 = vmatpush1.bf16.xpose.msra.mxu0 0
    %493 = vmatprep.subr.bf16.mxu0 0
    %494 = vmatpush1.bf16.xpose.msra.mxu0 0
    %495 = vmatprep.subr.bf16.mxu0 0
    %496 = vmatpush1.bf16.xpose.msra.mxu0 0
    %497 = vmatprep.subr.bf16.mxu0 0
    %498 = vmatpush1.bf16.xpose.msra.mxu0 0
    %499 = vmatprep.subr.bf16.mxu0 0
    %500 = vmatpush1.bf16.xpose.msra.mxu0 0
    %501 = vmatprep.subr.bf16.mxu0 0
    %502 = vmatpush1.bf16.xpose.msra.mxu0 0
    %503 = vmatprep.subr.bf16.mxu0 0
    %504 = vmatpush1.bf16.xpose.msra.mxu0 0
    %505 = vmatprep.subr.bf16.mxu0 0
    %506 = vmatpush1.bf16.xpose.msra.mxu0 0
    %507 = vmatprep.mubr.bf16.mxu0 %v472
    %508 = vmatmul.mubr.bf16.gmra.mrb[0].mxu0 %v471
    %v509 = vpop.f32.mrb[0].mxu0
    %v510 = vadd.f32 %v322, %v509
    %v511 = vpop.f32.mrb[0].mxu0
    %v512 = vpop.f32.mrb[0].mxu0
    %v513 = vpop.f32.mrb[0].mxu0
    %514 = vdwg.mxu0
    %v515 = vrot.slane %v215, 4
    %v516 = vrot.slane %v216, 4
    %519 = vmatprep.subr.bf16.mxu0 %v328
    %520 = vmatpush1.bf16.xpose.msra.mxu0 %v327
    %521 = vmatprep.subr.bf16.mxu0 %v330
    %522 = vmatpush1.bf16.xpose.msra.mxu0 %v329
    %523 = vmatprep.subr.bf16.mxu0 0
    %524 = vmatpush1.bf16.xpose.msra.mxu0 0
    %525 = vmatprep.subr.bf16.mxu0 0
    %526 = vmatpush1.bf16.xpose.msra.mxu0 0
    %527 = vmatprep.subr.bf16.mxu0 0
    %528 = vmatpush1.bf16.xpose.msra.mxu0 0
    %529 = vmatprep.subr.bf16.mxu0 0
    %530 = vmatpush1.bf16.xpose.msra.mxu0 0
    %531 = vmatprep.subr.bf16.mxu0 0
    %532 = vmatpush1.bf16.xpose.msra.mxu0 0
    %533 = vmatprep.subr.bf16.mxu0 0
    %534 = vmatpush1.bf16.xpose.msra.mxu0 0
    %535 = vmatprep.subr.bf16.mxu0 0
    %536 = vmatpush1.bf16.xpose.msra.mxu0 0
    %537 = vmatprep.subr.bf16.mxu0 0
    %538 = vmatpush1.bf16.xpose.msra.mxu0 0
    %539 = vmatprep.subr.bf16.mxu0 0
    %540 = vmatpush1.bf16.xpose.msra.mxu0 0
    %541 = vmatprep.subr.bf16.mxu0 0
    %542 = vmatpush1.bf16.xpose.msra.mxu0 0
    %543 = vmatprep.subr.bf16.mxu0 0
    %544 = vmatpush1.bf16.xpose.msra.mxu0 0
    %545 = vmatprep.subr.bf16.mxu0 0
    %546 = vmatpush1.bf16.xpose.msra.mxu0 0
    %547 = vmatprep.subr.bf16.mxu0 0
    %548 = vmatpush1.bf16.xpose.msra.mxu0 0
    %549 = vmatprep.subr.bf16.mxu0 0
    %550 = vmatpush1.bf16.xpose.msra.mxu0 0
    %551 = vmatprep.mubr.bf16.mxu0 %v516
    %552 = vmatmul.mubr.bf16.gmra.mrb[0].mxu0 %v515
    %v553 = vpop.f32.mrb[0].mxu0
    %v554 = vadd.f32 %v374, %v553
    %v555 = vpop.f32.mrb[0].mxu0
    %v556 = vpop.f32.mrb[0].mxu0
    %v557 = vpop.f32.mrb[0].mxu0
    %558 = vdwg.mxu0
    %v559 = vrot.slane %v215, 6
    %v560 = vrot.slane %v216, 6
    %563 = vmatprep.subr.bf16.mxu0 %v380
    %564 = vmatpush1.bf16.xpose.msra.mxu0 %v379
    %565 = vmatprep.subr.bf16.mxu0 %v382
    %566 = vmatpush1.bf16.xpose.msra.mxu0 %v381
    %567 = vmatprep.subr.bf16.mxu0 0
    %568 = vmatpush1.bf16.xpose.msra.mxu0 0
    %569 = vmatprep.subr.bf16.mxu0 0
    %570 = vmatpush1.bf16.xpose.msra.mxu0 0
    %571 = vmatprep.subr.bf16.mxu0 0
    %572 = vmatpush1.bf16.xpose.msra.mxu0 0
    %573 = vmatprep.subr.bf16.mxu0 0
    %574 = vmatpush1.bf16.xpose.msra.mxu0 0
    %575 = vmatprep.subr.bf16.mxu0 0
    %576 = vmatpush1.bf16.xpose.msra.mxu0 0
    %577 = vmatprep.subr.bf16.mxu0 0
    %578 = vmatpush1.bf16.xpose.msra.mxu0 0
    %579 = vmatprep.subr.bf16.mxu0 0
    %580 = vmatpush1.bf16.xpose.msra.mxu0 0
    %581 = vmatprep.subr.bf16.mxu0 0
    %582 = vmatpush1.bf16.xpose.msra.mxu0 0
    %583 = vmatprep.subr.bf16.mxu0 0
    %584 = vmatpush1.bf16.xpose.msra.mxu0 0
    %585 = vmatprep.subr.bf16.mxu0 0
    %586 = vmatpush1.bf16.xpose.msra.mxu0 0
    %587 = vmatprep.subr.bf16.mxu0 0
    %588 = vmatpush1.bf16.xpose.msra.mxu0 0
    %589 = vmatprep.subr.bf16.mxu0 0
    %590 = vmatpush1.bf16.xpose.msra.mxu0 0
    %591 = vmatprep.subr.bf16.mxu0 0
    %592 = vmatpush1.bf16.xpose.msra.mxu0 0
    %593 = vmatprep.subr.bf16.mxu0 0
    %594 = vmatpush1.bf16.xpose.msra.mxu0 0
    %595 = vmatprep.mubr.bf16.mxu0 %v560
    %596 = vmatmul.mubr.bf16.gmra.mrb[0].mxu0 %v559
    %v597 = vpop.f32.mrb[0].mxu0
    %v598 = vadd.f32 %v426, %v597
    %v599 = vpop.f32.mrb[0].mxu0
    %v600 = vpop.f32.mrb[0].mxu0
    %v601 = vpop.f32.mrb[0].mxu0
    %602 = vdwg.mxu0
    %v603 = vadd.f32 %v466, %v510
    %v604 = vadd.f32 %v554, %v598
    %v605 = vadd.f32 %v603, %v604
    %v606 = vlaneseq
    %v607 = vshrl.u32 %v606, 7
    %v608 = vsub.s32 0, %v607
    %v609 = vrot.slane %v67, %v608
    %v610 = vadd.f32 %v605, %v609
    %v611 = vmax.f32 %v610, 0.0
    %v612 = vpack.c.bf16 %v611, %v611
    %v613 = vld [vmem:[%s1] sm:$0x3]
    %v614 = vpack.c.bf16 %v613, %v613
    %vm615 = vcmask 48128
    %v617 = vsel %vm615, %v614, 0
    %vm619 = vcmask 1042432
    %v621 = vsel %vm619, %v64, 0
    %623 = vmatprep.subr.bf16.mxu0 0
    %624 = vmatpush1.bf16.msra.mxu0 %v621
    %625 = vmatprep.subr.bf16.mxu0 0
    %626 = vmatpush1.bf16.msra.mxu0 0
    %627 = vmatprep.subr.bf16.mxu0 0
    %628 = vmatpush1.bf16.msra.mxu0 0
    %629 = vmatprep.subr.bf16.mxu0 0
    %630 = vmatpush1.bf16.msra.mxu0 0
    %631 = vmatprep.subr.bf16.mxu0 0
    %632 = vmatpush1.bf16.msra.mxu0 0
    %633 = vmatprep.subr.bf16.mxu0 0
    %634 = vmatpush1.bf16.msra.mxu0 0
    %635 = vmatprep.subr.bf16.mxu0 0
    %636 = vmatpush1.bf16.msra.mxu0 0
    %637 = vmatprep.subr.bf16.mxu0 0
    %638 = vmatpush1.bf16.msra.mxu0 0
    %639 = vmatprep.subr.bf16.mxu0 0
    %640 = vmatpush1.bf16.msra.mxu0 0
    %641 = vmatprep.subr.bf16.mxu0 0
    %642 = vmatpush1.bf16.msra.mxu0 0
    %643 = vmatprep.subr.bf16.mxu0 0
    %644 = vmatpush1.bf16.msra.mxu0 0
    %645 = vmatprep.subr.bf16.mxu0 0
    %646 = vmatpush1.bf16.msra.mxu0 0
    %647 = vmatprep.subr.bf16.mxu0 0
    %648 = vmatpush1.bf16.msra.mxu0 0
    %649 = vmatprep.subr.bf16.mxu0 0
    %650 = vmatpush1.bf16.msra.mxu0 0
    %651 = vmatprep.subr.bf16.mxu0 0
    %652 = vmatpush1.bf16.msra.mxu0 0
    %653 = vmatprep.subr.bf16.mxu0 0
    %654 = vmatpush1.bf16.msra.mxu0 0
    %655 = vmatprep.mubr.bf16.mxu0 0
    %656 = vmatmul.mubr.bf16.gmra.mrb[0].mxu0 %v617
    %v657 = vpop.f32.mrb[0].mxu0
    %v658 = vadd.f32 0.0, %v657
    %v659 = vpop.f32.mrb[0].mxu0
    %v660 = vpop.f32.mrb[0].mxu0
    %v661 = vpop.f32.mrb[0].mxu0
    %662 = vdwg.mxu0
    %v667 = vunpack.c.l.b16 %v56
    %v668 = vunpack.c.l.b16 %v57
    %v669 = vunpack.c.l.b16 %v58
    %v670 = vunpack.c.l.b16 %v59
    %v671 = vpack.c.b16 %v668, %v667
    %v672 = vpack.c.b16 %v670, %v669
    %vm675 = vcmask 261120
    %v677 = vsel %vm675, %v612, 0
    %679 = vmatprep.subr.bf16.mxu0 0
    %680 = vmatpush1.bf16.msra.mxu0 %v671
    %681 = vmatprep.subr.bf16.mxu0 0
    %682 = vmatpush1.bf16.msra.mxu0 %v672
    %683 = vmatprep.subr.bf16.mxu0 0
    %684 = vmatpush1.bf16.msra.mxu0 0
    %685 = vmatprep.subr.bf16.mxu0 0
    %686 = vmatpush1.bf16.msra.mxu0 0
    %687 = vmatprep.subr.bf16.mxu0 0
    %688 = vmatpush1.bf16.msra.mxu0 0
    %689 = vmatprep.subr.bf16.mxu0 0
    %690 = vmatpush1.bf16.msra.mxu0 0
    %691 = vmatprep.subr.bf16.mxu0 0
    %692 = vmatpush1.bf16.msra.mxu0 0
    %693 = vmatprep.subr.bf16.mxu0 0
    %694 = vmatpush1.bf16.msra.mxu0 0
    %695 = vmatprep.subr.bf16.mxu0 0
    %696 = vmatpush1.bf16.msra.mxu0 0
    %697 = vmatprep.subr.bf16.mxu0 0
    %698 = vmatpush1.bf16.msra.mxu0 0
    %699 = vmatprep.subr.bf16.mxu0 0
    %700 = vmatpush1.bf16.msra.mxu0 0
    %701 = vmatprep.subr.bf16.mxu0 0
    %702 = vmatpush1.bf16.msra.mxu0 0
    %703 = vmatprep.subr.bf16.mxu0 0
    %704 = vmatpush1.bf16.msra.mxu0 0
    %705 = vmatprep.subr.bf16.mxu0 0
    %706 = vmatpush1.bf16.msra.mxu0 0
    %707 = vmatprep.subr.bf16.mxu0 0
    %708 = vmatpush1.bf16.msra.mxu0 0
    %709 = vmatprep.subr.bf16.mxu0 0
    %710 = vmatpush1.bf16.msra.mxu0 0
    %711 = vmatprep.mubr.bf16.mxu0 0
    %712 = vmatmul.mubr.bf16.gmra.mrb[0].mxu0 %v677
    %v713 = vpop.f32.mrb[0].mxu0
    %v714 = vadd.f32 %v658, %v713
    %v715 = vpop.f32.mrb[0].mxu0
    %v716 = vpop.f32.mrb[0].mxu0
    %v717 = vpop.f32.mrb[0].mxu0
    %718 = vdwg.mxu0
    %v719 = vlaneseq
    %v720 = vshrl.u32 %v719, 7
    %v721 = vsub.s32 0, %v720
    %v722 = vrot.slane %v68, %v721
    %v723 = vadd.f32 %v714, %v722
    %v724 = vmax.f32 %v723, 0.0
    %v725 = vpack.c.bf16 %v724, %v724
    %v726 = vlaneseq
    %v727 = vshrl.u32 %v726, 7
    %v728 = vsub.s32 0, %v727
    %v729 = vrot.slane %v69, %v728
    %v734 = vunpack.c.l.b16 %v60
    %v735 = vunpack.c.l.b16 %v61
    %v736 = vunpack.c.l.b16 %v62
    %v737 = vunpack.c.l.b16 %v63
    %v738 = vpack.c.b16 %v735, %v734
    %v739 = vpack.c.b16 %v737, %v736
    %v743 = vsel %vm675, %v725, 0
    %745 = vmatprep.subr.bf16.mxu0 0
    %746 = vmatpush1.bf16.msra.mxu0 %v738
    %747 = vmatprep.subr.bf16.mxu0 0
    %748 = vmatpush1.bf16.msra.mxu0 %v739
    %749 = vmatprep.subr.bf16.mxu0 0
    %750 = vmatpush1.bf16.msra.mxu0 0
    %751 = vmatprep.subr.bf16.mxu0 0
    %752 = vmatpush1.bf16.msra.mxu0 0
    %753 = vmatprep.subr.bf16.mxu0 0
    %754 = vmatpush1.bf16.msra.mxu0 0
    %755 = vmatprep.subr.bf16.mxu0 0
    %756 = vmatpush1.bf16.msra.mxu0 0
    %757 = vmatprep.subr.bf16.mxu0 0
    %758 = vmatpush1.bf16.msra.mxu0 0
    %759 = vmatprep.subr.bf16.mxu0 0
    %760 = vmatpush1.bf16.msra.mxu0 0
    %761 = vmatprep.subr.bf16.mxu0 0
    %762 = vmatpush1.bf16.msra.mxu0 0
    %763 = vmatprep.subr.bf16.mxu0 0
    %764 = vmatpush1.bf16.msra.mxu0 0
    %765 = vmatprep.subr.bf16.mxu0 0
    %766 = vmatpush1.bf16.msra.mxu0 0
    %767 = vmatprep.subr.bf16.mxu0 0
    %768 = vmatpush1.bf16.msra.mxu0 0
    %769 = vmatprep.subr.bf16.mxu0 0
    %770 = vmatpush1.bf16.msra.mxu0 0
    %771 = vmatprep.subr.bf16.mxu0 0
    %772 = vmatpush1.bf16.msra.mxu0 0
    %773 = vmatprep.subr.bf16.mxu0 0
    %774 = vmatpush1.bf16.msra.mxu0 0
    %775 = vmatprep.subr.bf16.mxu0 0
    %776 = vmatpush1.bf16.msra.mxu0 0
    %777 = vmatprep.mubr.bf16.mxu0 0
    %778 = vmatmul.mubr.bf16.gmra.mrb[0].mxu0 %v743
    %v779 = vpop.f32.mrb[0].mxu0
    %v780 = vadd.f32 %v729, %v779
    %v781 = vpop.f32.mrb[0].mxu0
    %v782 = vpop.f32.mrb[0].mxu0
    %v783 = vpop.f32.mrb[0].mxu0
    %784 = vdwg.mxu0
    %v785 = vmax.f32 %v780, 0.0
    %v786 = vlaneseq
    %v787 = vshrl.u32 %v786, 7
    %v788 = vsub.s32 0, %v787
    %v789 = vrot.slane %v70, %v788
    %v790 = vmul.f32 %v785, %v789
    %vm791 = vcmask 254976
    %v792 = vsel %vm791, %v790, 0.0
    %793 = vadd.xlane.f32.xlu0 %v792
    %v794 = vpop.xlane.xlu0 %793
    %v795 = vlaneseq
    %v796 = vshrl.u32 %v795, 7
    %v797 = vsub.s32 0, %v796
    %v798 = vrot.slane %v71, %v797
    %v799 = vadd.f32 %v794, %v798
    %vm800 = vcmask 1024
    %801 = vst.msk [vmem:[%s5] sm:$0x3] %vm800, %v799
    // Predicated region
    $region18: #{continuous_qnet_forward.1} parent=1 // pred_check
      _
    $region19: #{continuous_qnet_forward.1} parent=1 // pred_check_branch
      %803 = sbr.rel (0) target = $region21
    $region20: #{continuous_qnet_forward.1} parent=1 // pred_region
      _
    $region21: #{continuous_qnet_forward.1} parent=1 // pred_fallthru
      _
    // Predicated region
    $region22: #{continuous_qnet_forward.1} parent=1 // pred_check
      _
    $region23: #{continuous_qnet_forward.1} parent=1 // pred_check_branch
      %805 = sbr.rel (0) target = $region25
    $region24: #{continuous_qnet_forward.1} parent=1 // pred_region
      _
    $region25: #{continuous_qnet_forward.1} parent=1 // pred_fallthru
      _
  %806 = vsyncmov [#allocation3]
  %s807 = vpop.sfrf %806
  %p808 = scmp.eq.s32.totalorder %s807, 0
  %p809 = pneg %p808
  %811 = shalt.err (%p809)

</llo_original>
